<compile_context>
chip_gen: v7x
topology: tpu7x:2x2x1
jax: 0.10.0
libtpu: 0.0.40
codegen_flags: <defaults>
</compile_context>

<pallas_src>
import functools

import jax
import jax.numpy as jnp
from jax.experimental import pallas as pl
from jax.experimental.pallas import tpu as pltpu


def _round_up(x, m):
    return (x + m - 1) // m * m


def _vmem_capacity_bytes():
    """Physical VMEM per TensorCore; conservative fallback = v7x (64 MiB)."""
    try:
        info = pltpu.get_tpu_info()
        cap = getattr(info, "vmem_capacity_bytes", None)
        if cap:
            return int(cap)
    except Exception:
        pass
    return 64 * 1024 * 1024


def _choose_tiling(n):
    """Pick (n_pad, tm, tk): big tiles for large graphs, >=2 row tiles for megacore."""
    if n <= 2048:
        n_pad = _round_up(n, 256)
        tk = n_pad                       # whole reduction axis in one step
        tm = 128 if n_pad == 256 else 256
    else:
        tm, tk = 512, 2048               # amortize ~0.35 us/step; 512x2048 bf16 = 2 MiB
        n_pad = _round_up(n, 2048)       # lcm(tm, tk)
    return n_pad, tm, tk


# ---------------------------------------------------------------------------
# Kernel 1: layer-1 aggregation (aggregate-first) + fused transform epilogue.
#   acc = sum_k A[i,k] @ X[k]                 (bf16 operands, f32 accumulation)
#   H   = leaky_relu(acc_bf16 @ W1 + b1)      (bf16 MXU, f32 epilogue math)
#   HW  = H_bf16 @ W2                         (layer-2 transform-first, emitted bf16)
# Epilogue is chunked over the ff dimension to keep live f32 bounded.
# ---------------------------------------------------------------------------
def _layer1_kernel(a_ref, x_ref, w1_ref, b1_ref, w2_ref, hw_ref, acc_ref,
                   *, tk, ff_chunk, x_resident):
    k = pl.program_id(1)

    @pl.when(k == 0)
    def _():
        acc_ref[...] = jnp.zeros_like(acc_ref)

    if x_resident:
        start = pl.multiple_of(k * tk, tk)
        x_blk = x_ref[pl.ds(start, tk), :]
    else:
        x_blk = x_ref[...]

    acc_ref[...] += jnp.dot(a_ref[...], x_blk, preferred_element_type=jnp.float32)

    @pl.when(k == pl.num_programs(1) - 1)
    def _():
        acc_bf = acc_ref[...].astype(jnp.bfloat16)
        ff_p = w1_ref.shape[1]
        hw = jnp.zeros(hw_ref.shape, jnp.float32)
        for fo in range(0, ff_p, ff_chunk):
            fe = min(fo + ff_chunk, ff_p)
            h = jnp.dot(acc_bf, w1_ref[:, fo:fe],
                        preferred_element_type=jnp.float32) + b1_ref[:, fo:fe]
            h = jnp.where(h > 0, h, jnp.float32(0.01) * h)   # leaky_relu (slope 0.01)
            # dropout(p=0) == identity
            hw = hw + jnp.dot(h.astype(jnp.bfloat16), w2_ref[fo:fe, :],
                              preferred_element_type=jnp.float32)
        hw_ref[...] = hw.astype(hw_ref.dtype)


# ---------------------------------------------------------------------------
# Kernel 2: layer-2 aggregation.   out = sum_k A[i,k] @ HW[k] + b2
# Output block is resident across the reduction axis -> accumulate in-place (f32).
# ---------------------------------------------------------------------------
def _layer2_kernel(a_ref, hw_ref, b2_ref, out_ref, *, tk, hw_resident):
    k = pl.program_id(1)

    @pl.when(k == 0)
    def _():
        out_ref[...] = jnp.zeros_like(out_ref) + b2_ref[...]

    if hw_resident:
        start = pl.multiple_of(k * tk, tk)
        hw_blk = hw_ref[pl.ds(start, tk), :]
    else:
        hw_blk = hw_ref[...]

    out_ref[...] += jnp.dot(a_ref[...], hw_blk, preferred_element_type=jnp.float32)


def gcn_norm_dense(edge_index, num_nodes):
    """Dense D^{-1/2}(A + I)D^{-1/2}; matches torch_geometric gcn_norm semantics.
    Note: duplicate edges accumulate weight > 1 (consistent with PyG sum-aggregation)."""
    src = edge_index[0]
    dst = edge_index[1]
    a = jnp.zeros((num_nodes, num_nodes), jnp.float32)
    a = a.at[dst, src].add(1.0)                        # message j -> i: row i, col j
    a = a + jnp.eye(num_nodes, dtype=jnp.float32)      # self loops
    deg = a.sum(axis=1)
    dinv = jnp.where(deg > 0, 1.0 / jnp.sqrt(deg), 0.0)
    return dinv[:, None] * a * dinv[None, :]


def gcn2_forward(x, edge_index, w1, b1, w2, b2):
    n, c_in = x.shape
    ff_d = w1.shape[1]
    c_out = w2.shape[1]

    # ---- tiling / padding ----------------------------------------------------
    n_pad, tm, tk = _choose_tiling(n)
    c_in_p = _round_up(c_in, 128)
    ff_p = _round_up(ff_d, 128)
    c_out_p = _round_up(c_out, 128)
    ff_chunk = min(ff_p, 512)

    # Build A_hat once and cast straight into the padded bf16 buffer (no padded
    # f32 (n_pad, n_pad) transient).
    a_hat = gcn_norm_dense(edge_index, n)
    a_bf = jnp.zeros((n_pad, n_pad), jnp.bfloat16).at[:n, :n].set(
        a_hat.astype(jnp.bfloat16))
    x_bf = jnp.zeros((n_pad, c_in_p), jnp.bfloat16).at[:n, :c_in].set(
        x.astype(jnp.bfloat16))
    w1_bf = jnp.zeros((c_in_p, ff_p), jnp.bfloat16).at[:c_in, :ff_d].set(
        w1.astype(jnp.bfloat16))
    w2_bf = jnp.zeros((ff_p, c_out_p), jnp.bfloat16).at[:ff_d, :c_out].set(
        w2.astype(jnp.bfloat16))
    b1_p = jnp.zeros((1, ff_p), jnp.float32).at[:, :ff_d].set(b1)
    b2_p = jnp.zeros((1, c_out_p), jnp.float32).at[:, :c_out].set(b2)

    # ---- per-generation VMEM budget & residency plan --------------------------
    vmem_cap = _vmem_capacity_bytes()
    vmem_limit = min(int(vmem_cap * 0.9), 100 * 1024 * 1024)
    budget = int(vmem_limit * 0.85)      # headroom for compiler scratch / spills

    def l1_vmem(x_res):
        a_buf = 2 * tm * tk * 2
        x_buf = 2 * (n_pad if x_res else tk) * c_in_p * 2
        w_buf = 2 * (c_in_p * ff_p + ff_p * c_out_p) * 2 + 2 * ff_p * 4
        out_buf = 2 * tm * c_out_p * 2
        acc = tm * c_in_p * 4
        return a_buf + x_buf + w_buf + out_buf + acc

    def l2_vmem(hw_res):
        a_buf = 2 * tm * tk * 2
        hw_buf = 2 * (n_pad if hw_res else tk) * c_out_p * 2
        out_buf = 2 * tm * c_out_p * 4
        return a_buf + hw_buf + out_buf + 2 * c_out_p * 4

    x_resident = l1_vmem(True) <= budget
    hw_resident = l2_vmem(True) <= budget

    grid = (n_pad // tm, n_pad // tk)
    row_blocks = n_pad // tm
    cparams = pltpu.CompilerParams(
        dimension_semantics=("parallel", "arbitrary"),
        vmem_limit_bytes=vmem_limit,
    )

    if x_resident:
        x_spec = pl.BlockSpec((n_pad, c_in_p), lambda i, k: (0, 0))   # DMA'd once
    else:
        x_spec = pl.BlockSpec((tk, c_in_p), lambda i, k: (k, 0))      # streamed

    # ---- layer 1 (+ fused H @ W2 transform) -----------------------------------
    l1_bytes = (a_bf.size * 2
                + (x_bf.size if x_resident else row_blocks * x_bf.size) * 2
                + w1_bf.size * 2 + w2_bf.size * 2 + b1_p.size * 4
                + n_pad * c_out_p * 2)
    hw = pl.pallas_call(
        functools.partial(_layer1_kernel, tk=tk, ff_chunk=ff_chunk,
                          x_resident=x_resident),
        out_shape=jax.ShapeDtypeStruct((n_pad, c_out_p), jnp.bfloat16),
        grid_spec=pltpu.PrefetchScalarGridSpec(
            num_scalar_prefetch=0,
            grid=grid,
            in_specs=[
                pl.BlockSpec((tm, tk), lambda i, k: (i, k)),           # A tile
                x_spec,                                                # X (resident/stream)
                pl.BlockSpec((c_in_p, ff_p), lambda i, k: (0, 0)),     # W1 (resident)
                pl.BlockSpec((1, ff_p), lambda i, k: (0, 0)),          # b1 (resident)
                pl.BlockSpec((ff_p, c_out_p), lambda i, k: (0, 0)),    # W2 (resident)
            ],
            out_specs=pl.BlockSpec((tm, c_out_p), lambda i, k: (i, 0)),
            scratch_shapes=[pltpu.VMEM((tm, c_in_p), jnp.float32)],
        ),
        compiler_params=cparams,
        cost_estimate=pl.CostEstimate(
            flops=2 * (n_pad * n_pad * c_in_p
                       + n_pad * c_in_p * ff_p
                       + n_pad * ff_p * c_out_p),
            transcendentals=0,
            bytes_accessed=int(l1_bytes),
        ),
    )(a_bf, x_bf, w1_bf, b1_p, w2_bf)

    if hw_resident:
        hw_spec = pl.BlockSpec((n_pad, c_out_p), lambda i, k: (0, 0))  # DMA'd once
    else:
        hw_spec = pl.BlockSpec((tk, c_out_p), lambda i, k: (k, 0))     # streamed

    # ---- layer 2 aggregation ---------------------------------------------------
    l2_bytes = (a_bf.size * 2
                + (1 if hw_resident else row_blocks) * n_pad * c_out_p * 2
                + b2_p.size * 4 + n_pad * c_out_p * 4)
    out_p = pl.pallas_call(
        functools.partial(_layer2_kernel, tk=tk, hw_resident=hw_resident),
        out_shape=jax.ShapeDtypeStruct((n_pad, c_out_p), jnp.float32),
        grid_spec=pltpu.PrefetchScalarGridSpec(
            num_scalar_prefetch=0,
            grid=grid,
            in_specs=[
                pl.BlockSpec((tm, tk), lambda i, k: (i, k)),           # A tile
                hw_spec,                                               # HW (resident/stream)
                pl.BlockSpec((1, c_out_p), lambda i, k: (0, 0)),       # b2 (resident)
            ],
            out_specs=pl.BlockSpec((tm, c_out_p), lambda i, k: (i, 0)),
        ),
        compiler_params=cparams,
        cost_estimate=pl.CostEstimate(
            flops=2 * n_pad * n_pad * c_out_p,
            transcendentals=0,
            bytes_accessed=int(l2_bytes),
        ),
    )(a_bf, hw, b2_p)

    return out_p[:n, :c_out]


def reference_forward(x, edge_index, w1, b1, w2, b2):
    """Pure-JAX reference. Mirrors the kernel's precision path (bf16 A_hat / X /
    W1 / W2 and bf16 staging of intermediates); accumulation in f32."""
    a_hat = gcn_norm_dense(edge_index, x.shape[0])
    a_bf = a_hat.astype(jnp.bfloat16).astype(jnp.float32)
    x_bf = x.astype(jnp.bfloat16).astype(jnp.float32)
    w1_bf = w1.astype(jnp.bfloat16).astype(jnp.float32)
    w2_bf = w2.astype(jnp.bfloat16).astype(jnp.float32)
    ax = (a_bf @ x_bf).astype(jnp.bfloat16).astype(jnp.float32)
    h = ax @ w1_bf + b1
    h = jnp.where(h > 0, h, 0.01 * h)
    hw = (h.astype(jnp.bfloat16).astype(jnp.float32) @ w2_bf)
    hw = hw.astype(jnp.bfloat16).astype(jnp.float32)
    return a_bf @ hw + b2


if __name__ == "__main__":
    key = jax.random.PRNGKey(0)
    k_x, k_e, k_w1, k_b1, k_w2, k_b2 = jax.random.split(key, 6)

    # small shapes: N=16 nodes, E=40 edges, in_channel=8, ff_d=32, out_channel=16
    N, E, C_IN, FF_D, C_OUT = 16, 40, 8, 32, 16

    x = jax.random.normal(k_x, (N, C_IN), dtype=jnp.float32)
    edge_index = jax.random.randint(k_e, (2, E), 0, N, dtype=jnp.int32)

    # deterministic glorot-ish init; stored [in, out] (transpose of PyTorch [out, in])
    w1 = jax.random.normal(k_w1, (C_IN, FF_D), dtype=jnp.float32) * (1.0 / jnp.sqrt(C_IN))
    b1 = jax.random.normal(k_b1, (1, FF_D), dtype=jnp.float32) * 0.01
    w2 = jax.random.normal(k_w2, (FF_D, C_OUT), dtype=jnp.float32) * (1.0 / jnp.sqrt(FF_D))
    b2 = jax.random.normal(k_b2, (1, C_OUT), dtype=jnp.float32) * 0.01

    out = gcn2_forward(x, edge_index, w1, b1, w2, b2)
    out = jax.block_until_ready(out)

    ref = reference_forward(x, edge_index, w1, b1, w2, b2)
    assert out.shape == (N, C_OUT)
    # 2e-2 tolerance covers bf16 operand staging + TPU default f32 matmul precision
    # in the reference; observed error is ~1e-3.
    assert jnp.allclose(out, ref, rtol=2e-2, atol=2e-2), (
        float(jnp.max(jnp.abs(out - ref))))

    print("KERNEL_OK")
</pallas_src>

<mosaic_0001>
module attributes {stable_mosaic.version = 11 : i64} {
  func.func @_layer1_kernel(%arg0: i32, %arg1: i32, %arg2: memref<128x256xbf16, #tpu.memory_space<vmem>>, %arg3: memref<256x128xbf16, #tpu.memory_space<vmem>>, %arg4: memref<128x128xbf16, #tpu.memory_space<vmem>>, %arg5: memref<1x128xf32, #tpu.memory_space<vmem>>, %arg6: memref<128x128xbf16, #tpu.memory_space<vmem>>, %arg7: memref<128x128xbf16, #tpu.memory_space<vmem>>, %arg8: memref<128x128xf32, #tpu.memory_space<vmem>>) attributes {dimension_semantics = [#tpu.dimension_semantics<parallel>, #tpu.dimension_semantics<arbitrary>], iteration_bounds = array<i64: 2, 1>, scalar_prefetch = 0 : i64, scratch_operands = 1 : i64, tpu.core_type = #tpu.core_type<tc>, window_params = [{transform_indices = @transform_0, window_bounds = array<i64: 128, 256>}, {pipeline_mode = #tpu.pipeline_mode<synchronous>, transform_indices = @transform_1, window_bounds = array<i64: 256, 128>}, {pipeline_mode = #tpu.pipeline_mode<synchronous>, transform_indices = @transform_2, window_bounds = array<i64: 128, 128>}, {pipeline_mode = #tpu.pipeline_mode<synchronous>, transform_indices = @transform_3, window_bounds = array<i64: 1, 128>}, {pipeline_mode = #tpu.pipeline_mode<synchronous>, transform_indices = @transform_4, window_bounds = array<i64: 128, 128>}, {transform_indices = @transform_5, window_bounds = array<i64: 128, 128>}]} {
    %c0_i32 = arith.constant 0 : i32
    %0 = arith.cmpi eq, %arg1, %c0_i32 : i32
    %1 = arith.extui %0 : i1 to i32
    %c0_i32_0 = arith.constant 0 : i32
    %2 = arith.cmpi ne, %1, %c0_i32_0 : i32
    scf.if %2 {
      %cst_9 = arith.constant 0.000000e+00 : f32
      %15 = vector.broadcast %cst_9 : f32 to vector<128x128xf32>
      %c0_10 = arith.constant 0 : index
      %c0_11 = arith.constant 0 : index
      %16 = vector.load %arg8[%c0_10, %c0_11] : memref<128x128xf32, #tpu.memory_space<vmem>>, vector<128x128xf32>
      tpu.vector_store %arg8[%c0_10, %c0_11], %15 {strides = array<i32>} : memref<128x128xf32, #tpu.memory_space<vmem>>, vector<128x128xf32>,
    } else {
    }
    %c256_i32 = arith.constant 256 : i32
    %3 = arith.muli %arg1, %c256_i32 : i32
    %4 = tpu.assume_multiple %3, 256 : i32
    %5 = arith.index_cast %4 : i32 to index
    %c0 = arith.constant 0 : index
    %6 = vector.load %arg3[%5, %c0] : memref<256x128xbf16, #tpu.memory_space<vmem>>, vector<256x128xbf16>
    %c0_1 = arith.constant 0 : index
    %c0_2 = arith.constant 0 : index
    %7 = vector.load %arg8[%c0_1, %c0_2] : memref<128x128xf32, #tpu.memory_space<vmem>>, vector<128x128xf32>
    %c0_3 = arith.constant 0 : index
    %c0_4 = arith.constant 0 : index
    %8 = vector.load %arg2[%c0_3, %c0_4] : memref<128x256xbf16, #tpu.memory_space<vmem>>, vector<128x256xbf16>
    %cst = arith.constant dense<0.000000e+00> : vector<128x128xf32>
    %9 = tpu.matmul %8, %6, %cst {dimension_numbers = #tpu.dot_dimension_numbers<[1], [0], [0], [1], [0, 0, 1, 1], [], []>} : vector<128x256xbf16>, vector<256x128xbf16>, vector<128x128xf32> -> vector<128x128xf32>
    %10 = arith.addf %7, %9 : vector<128x128xf32>
    %c0_5 = arith.constant 0 : index
    %c0_6 = arith.constant 0 : index
    %11 = vector.load %arg8[%c0_5, %c0_6] : memref<128x128xf32, #tpu.memory_space<vmem>>, vector<128x128xf32>
    tpu.vector_store %arg8[%c0_5, %c0_6], %10 {strides = array<i32>} : memref<128x128xf32, #tpu.memory_space<vmem>>, vector<128x128xf32>,
    %c0_i32_7 = arith.constant 0 : i32
    %12 = arith.cmpi eq, %arg1, %c0_i32_7 : i32
    %13 = arith.extui %12 : i1 to i32
    %c0_i32_8 = arith.constant 0 : i32
    %14 = arith.cmpi ne, %13, %c0_i32_8 : i32
    scf.if %14 {
      %c0_9 = arith.constant 0 : index
      %c0_10 = arith.constant 0 : index
      %15 = vector.load %arg8[%c0_9, %c0_10] : memref<128x128xf32, #tpu.memory_space<vmem>>, vector<128x128xf32>
      %16 = arith.truncf %15 : vector<128x128xf32> to vector<128x128xbf16>
      %cst_11 = arith.constant 0.000000e+00 : f32
      %17 = vector.broadcast %cst_11 : f32 to vector<128x128xf32>
      %c0_12 = arith.constant 0 : index
      %c0_13 = arith.constant 0 : index
      %18 = vector.load %arg4[%c0_12, %c0_13] : memref<128x128xbf16, #tpu.memory_space<vmem>>, vector<128x128xbf16>
      %cst_14 = arith.constant dense<0.000000e+00> : vector<128x128xf32>
      %19 = tpu.matmul %16, %18, %cst_14 {dimension_numbers = #tpu.dot_dimension_numbers<[1], [0], [0], [1], [0, 0, 1, 1], [], []>} : vector<128x128xbf16>, vector<128x128xbf16>, vector<128x128xf32> -> vector<128x128xf32>
      %c0_15 = arith.constant 0 : index
      %c0_16 = arith.constant 0 : index
      %20 = vector.load %arg5[%c0_15, %c0_16] : memref<1x128xf32, #tpu.memory_space<vmem>>, vector<1x128xf32>
      %21 = vector.broadcast %20 : vector<1x128xf32> to vector<128x128xf32>
      %22 = arith.addf %19, %21 : vector<128x128xf32>
      %cst_17 = arith.constant 0.000000e+00 : f32
      %23 = vector.broadcast %cst_17 : f32 to vector<128x128xf32>
      %24 = arith.cmpf ogt, %22, %23 : vector<128x128xf32>
      %cst_18 = arith.constant 0.00999999977 : f32
      %25 = vector.broadcast %cst_18 : f32 to vector<128x128xf32>
      %26 = arith.mulf %25, %22 : vector<128x128xf32>
      %27 = arith.select %24, %22, %26 : vector<128x128xi1>, vector<128x128xf32>
      %28 = arith.truncf %27 : vector<128x128xf32> to vector<128x128xbf16>
      %c0_19 = arith.constant 0 : index
      %c0_20 = arith.constant 0 : index
      %29 = vector.load %arg6[%c0_19, %c0_20] : memref<128x128xbf16, #tpu.memory_space<vmem>>, vector<128x128xbf16>
      %cst_21 = arith.constant dense<0.000000e+00> : vector<128x128xf32>
      %30 = tpu.matmul %28, %29, %cst_21 {dimension_numbers = #tpu.dot_dimension_numbers<[1], [0], [0], [1], [0, 0, 1, 1], [], []>} : vector<128x128xbf16>, vector<128x128xbf16>, vector<128x128xf32> -> vector<128x128xf32>
      %31 = arith.addf %17, %30 : vector<128x128xf32>
      %32 = arith.truncf %31 : vector<128x128xf32> to vector<128x128xbf16>
      %c0_22 = arith.constant 0 : index
      %c0_23 = arith.constant 0 : index
      %33 = vector.load %arg7[%c0_22, %c0_23] : memref<128x128xbf16, #tpu.memory_space<vmem>>, vector<128x128xbf16>
      tpu.vector_store %arg7[%c0_22, %c0_23], %32 {strides = array<i32>} : memref<128x128xbf16, #tpu.memory_space<vmem>>, vector<128x128xbf16>,
    } else {
    }
    return
  }
  func.func @transform_0(%arg0: i32, %arg1: i32) -> (i32, i32) {
    %c0_i32 = arith.constant 0 : i32
    return %arg0, %arg1 : i32, i32
  }
  func.func @transform_1(%arg0: i32, %arg1: i32) -> (i32, i32) {
    %c0_i32 = arith.constant 0 : i32
    %c0_i32_0 = arith.constant 0 : i32
    %c0_i32_1 = arith.constant 0 : i32
    return %c0_i32, %c0_i32_0 : i32, i32
  }
  func.func @transform_2(%arg0: i32, %arg1: i32) -> (i32, i32) {
    %c0_i32 = arith.constant 0 : i32
    %c0_i32_0 = arith.constant 0 : i32
    %c0_i32_1 = arith.constant 0 : i32
    return %c0_i32, %c0_i32_0 : i32, i32
  }
  func.func @transform_3(%arg0: i32, %arg1: i32) -> (i32, i32) {
    %c0_i32 = arith.constant 0 : i32
    %c0_i32_0 = arith.constant 0 : i32
    %c0_i32_1 = arith.constant 0 : i32
    return %c0_i32, %c0_i32_0 : i32, i32
  }
  func.func @transform_4(%arg0: i32, %arg1: i32) -> (i32, i32) {
    %c0_i32 = arith.constant 0 : i32
    %c0_i32_0 = arith.constant 0 : i32
    %c0_i32_1 = arith.constant 0 : i32
    return %c0_i32, %c0_i32_0 : i32, i32
  }
  func.func @transform_5(%arg0: i32, %arg1: i32) -> (i32, i32) {
    %c0_i32 = arith.constant 0 : i32
    %c0_i32_0 = arith.constant 0 : i32
    return %arg0, %c0_i32 : i32, i32
  }
}

</mosaic_0001>

<llo_original>
// kernel: tpu_custom_call.1
$region0: #{tpu_custom_call.1}
  #allocation0 [shape = 'u32[]', space=smem, size = 0x4, offset = 0x4, fixed_abs, tag = 'smem constant byte address 0x4 - core index']
  #allocation1 [shape = 'u32[144,128]{1,0:T(1,128)}', space=vmem, size = 0x12000, scoped, tag = 'internal scratch']
  #allocation2 [shape = 'f32[128,128]{1,0:T(8,128)}', space=vmem, size = 0x10000, scoped, tag = 'scratch operand']
  %s0 = inlined_call_operand.hbm [shape: bf16[256,256], index: 0, kind: input, shape index: {}]
  %s1 = inlined_call_operand.hbm [shape: bf16[256,128], index: 1, kind: input, shape index: {}]
  %s2 = inlined_call_operand.hbm [shape: bf16[128,128], index: 2, kind: input, shape index: {}]
  %s3 = inlined_call_operand.vmem [shape: f32[1,128], index: 3, kind: input, shape index: {}]
  %s4 = inlined_call_operand.hbm [shape: bf16[128,128], index: 4, kind: input, shape index: {}]
  %s5 = inlined_call_operand.hbm [shape: bf16[256,128], index: 5, kind: output, shape index: {}]
  %s6 = sld [smem:[#allocation0]]
  $region77: #{tpu_custom_call.1} parent=0
    _
  %s8 = ssub.s32 1, %s6
  %s9 = scalar_select 0, %s8, %s6
  $region1: #{tpu_custom_call.1} parent=0
    #allocation3 [shape = 'u8[131072]{0}', space=vmem, size = 0x20000, scoped, tag = 'input window, operand 0']
    #allocation4 [shape = 's32[2]{0}', space=sflag, size = 0x8, scoped, tag = 'scoped memory for tpu_custom_call.1']
    #allocation5 [shape = 's32[2]{0}', space=sflag, size = 0x8, scoped, tag = 'scoped memory for tpu_custom_call.1']
    #allocation6 [shape = 'u8[65536]{0}', space=vmem, size = 0x10000, scoped, tag = 'input window, operand 1, single buffered']
    #allocation7 [shape = 's32[1]{0}', space=sflag, size = 0x4, scoped, tag = 'scoped memory for tpu_custom_call.1']
    #allocation8 [shape = 'u8[32768]{0}', space=vmem, size = 0x8000, scoped, tag = 'input window, operand 2, single buffered']
    #allocation9 [shape = 'u8[32768]{0}', space=vmem, size = 0x8000, scoped, tag = 'input window, operand 4, single buffered']
    #allocation10 [shape = 's32[1]{0}', space=sflag, size = 0x4, scoped, tag = 'scoped memory for tpu_custom_call.1']
    #allocation11 [shape = 'u8[65536]{0}', space=vmem, size = 0x10000, scoped, tag = 'output window, operand 0']
    %10 = vsyncpa [#allocation4], 0
    %s11 = scalar_lea.sflag [#allocation4], 1
    %12 = vsyncpa %s11, 0
    %13 = vsyncpa [#allocation7], 0
    %14 = vsyncpa [#allocation10], 0
    %15 = vsyncpa [#allocation5], 0
    %s16 = scalar_lea.sflag [#allocation5], 1
    %17 = vsyncpa %s16, 0
    loop: start=0, step=1, limit=4
    $region2: #{tpu_custom_call.1} parent=1 // loop_pre_header
      _
    $region3: #{tpu_custom_call.1} parent=1 // loop_header
      %s19 = sphi 0, %s23
      %p20 = scmp.ge.s32.totalorder %s19, 4
      %s26 = sphi 0, %s38
      %s27 = sphi 0, %s34
      %s28 = sphi 0, %s26
      %s29 = sphi 0, %s27
      %s30 = sphi 0, %s28
      %s31 = sphi 0, %s29
      %s43 = sphi 0, %s45
      %s46 = sphi 0, %s43
      %s47 = sphi 0, %s46
      %s63 = sphi 0, %s47
      %s67 = sphi 0, %s67
      %s69 = sphi 0, %s67
      %s70 = sphi 0, %s69
      %s84 = sphi 0, %s70
      %s88 = sphi 0, %s88
      %s90 = sphi 0, %s88
      %s91 = sphi 0, %s90
      %s105 = sphi 0, %s91
      %s109 = sphi 0, %s109
      %s111 = sphi 0, %s109
      %s112 = sphi 0, %s111
      %s126 = sphi 0, %s112
      %s130 = sphi 0, %s130
      %s132 = sphi 0, %s130
      %s133 = sphi 0, %s132
      %s147 = sphi 0, %s133
      %s153 = sphi 0, %s155
      %s156 = sphi 0, %s153
      %s157 = sphi 0, %s156
      %s173 = sphi 0, %s157
    $region4: #{tpu_custom_call.1} parent=1 // loop_header_branch
      %22 = sbr.rel (%p20) target = $region8
    $region5: #{tpu_custom_call.1} parent=1 // loop_body
      %s24 = ssub.s32 %s19, 1
      %s25 = ssub.s32 %s19, 2
      %s32 = sadd.s32 1, %s27
      %p33 = scmp.ge.s32.totalorder %s32, 1
      %s34 = scalar_select %p33, 0, %s32
      %s35 = sadd.s32 1, %s26
      %s36 = scalar_select %p33, %s35, %s26
      %p37 = scmp.ge.s32.totalorder %s36, 2
      %s38 = scalar_select %p37, 0, %s36
      %s39 = ssub.s32 %s26, %s38
      %s40 = ssub.s32 %s27, %s34
      %s41 = sor.u32 %s39, %s40
      %p42 = scmp.eq.s32.totalorder %s41, 0
      %s44 = sadd.s32 %s43, 1
      %s45 = scalar_select %p42, %s43, %s44
      %p48 = pneg %p42
      %p49 = scmp.eq.s32.totalorder %s19, 1
      %p50 = por %p48, %p49
      %p51 = scmp.ne.s32.totalorder %s43, %s46
      %p52 = scmp.eq.s32.totalorder %s19, 0
      %p53 = por %p51, %p52
      %p54 = scmp.ne.s32.totalorder %s43, %s46
      %p55 = scmp.eq.s32.totalorder %s24, 1
      %p56 = por %p54, %p55
      %p57 = scmp.ne.s32.totalorder %s46, %s47
      %p58 = scmp.eq.s32.totalorder %s24, 0
      %p59 = por %p57, %p58
      %p60 = scmp.ne.s32.totalorder %s46, %s47
      %p61 = scmp.eq.s32.totalorder %s25, 1
      %p62 = por %p60, %p61
      %p64 = scmp.ne.s32.totalorder %s47, %s63
      %p65 = scmp.eq.s32.totalorder %s25, 0
      %p66 = por %p64, %p65
      %s68 = sadd.s32 %s67, 1
      %p71 = scmp.eq.s32.totalorder %s19, 1
      %p72 = scmp.ne.s32.totalorder %s67, %s69
      %p73 = scmp.eq.s32.totalorder %s19, 0
      %p74 = por %p72, %p73
      %p75 = scmp.ne.s32.totalorder %s67, %s69
      %p76 = scmp.eq.s32.totalorder %s24, 1
      %p77 = por %p75, %p76
      %p78 = scmp.ne.s32.totalorder %s69, %s70
      %p79 = scmp.eq.s32.totalorder %s24, 0
      %p80 = por %p78, %p79
      %p81 = scmp.ne.s32.totalorder %s69, %s70
      %p82 = scmp.eq.s32.totalorder %s25, 1
      %p83 = por %p81, %p82
      %p85 = scmp.ne.s32.totalorder %s70, %s84
      %p86 = scmp.eq.s32.totalorder %s25, 0
      %p87 = por %p85, %p86
      %s89 = sadd.s32 %s88, 1
      %p92 = scmp.eq.s32.totalorder %s19, 1
      %p93 = scmp.ne.s32.totalorder %s88, %s90
      %p94 = scmp.eq.s32.totalorder %s19, 0
      %p95 = por %p93, %p94
      %p96 = scmp.ne.s32.totalorder %s88, %s90
      %p97 = scmp.eq.s32.totalorder %s24, 1
      %p98 = por %p96, %p97
      %p99 = scmp.ne.s32.totalorder %s90, %s91
      %p100 = scmp.eq.s32.totalorder %s24, 0
      %p101 = por %p99, %p100
      %p102 = scmp.ne.s32.totalorder %s90, %s91
      %p103 = scmp.eq.s32.totalorder %s25, 1
      %p104 = por %p102, %p103
      %p106 = scmp.ne.s32.totalorder %s91, %s105
      %p107 = scmp.eq.s32.totalorder %s25, 0
      %p108 = por %p106, %p107
      %s110 = sadd.s32 %s109, 1
      %p113 = scmp.eq.s32.totalorder %s19, 1
      %p114 = scmp.ne.s32.totalorder %s109, %s111
      %p115 = scmp.eq.s32.totalorder %s19, 0
      %p116 = por %p114, %p115
      %p117 = scmp.ne.s32.totalorder %s109, %s111
      %p118 = scmp.eq.s32.totalorder %s24, 1
      %p119 = por %p117, %p118
      %p120 = scmp.ne.s32.totalorder %s111, %s112
      %p121 = scmp.eq.s32.totalorder %s24, 0
      %p122 = por %p120, %p121
      %p123 = scmp.ne.s32.totalorder %s111, %s112
      %p124 = scmp.eq.s32.totalorder %s25, 1
      %p125 = por %p123, %p124
      %p127 = scmp.ne.s32.totalorder %s112, %s126
      %p128 = scmp.eq.s32.totalorder %s25, 0
      %p129 = por %p127, %p128
      %s131 = sadd.s32 %s130, 1
      %p134 = scmp.eq.s32.totalorder %s19, 1
      %p135 = scmp.ne.s32.totalorder %s130, %s132
      %p136 = scmp.eq.s32.totalorder %s19, 0
      %p137 = por %p135, %p136
      %p138 = scmp.ne.s32.totalorder %s130, %s132
      %p139 = scmp.eq.s32.totalorder %s24, 1
      %p140 = por %p138, %p139
      %p141 = scmp.ne.s32.totalorder %s132, %s133
      %p142 = scmp.eq.s32.totalorder %s24, 0
      %p143 = por %p141, %p142
      %p144 = scmp.ne.s32.totalorder %s132, %s133
      %p145 = scmp.eq.s32.totalorder %s25, 1
      %p146 = por %p144, %p145
      %p148 = scmp.ne.s32.totalorder %s133, %s147
      %p149 = scmp.eq.s32.totalorder %s25, 0
      %p150 = por %p148, %p149
      %s151 = ssub.s32 %s26, %s38
      %p152 = scmp.eq.s32.totalorder %s151, 0
      %s154 = sadd.s32 %s153, 1
      %s155 = scalar_select %p152, %s153, %s154
      %p158 = pneg %p152
      %p159 = scmp.eq.s32.totalorder %s19, 1
      %p160 = por %p158, %p159
      %p161 = scmp.ne.s32.totalorder %s153, %s156
      %p162 = scmp.eq.s32.totalorder %s19, 0
      %p163 = por %p161, %p162
      %p164 = scmp.ne.s32.totalorder %s153, %s156
      %p165 = scmp.eq.s32.totalorder %s24, 1
      %p166 = por %p164, %p165
      %p167 = scmp.ne.s32.totalorder %s156, %s157
      %p168 = scmp.eq.s32.totalorder %s24, 0
      %p169 = por %p167, %p168
      %p170 = scmp.ne.s32.totalorder %s156, %s157
      %p171 = scmp.eq.s32.totalorder %s25, 1
      %p172 = por %p170, %p171
      %p174 = scmp.ne.s32.totalorder %s157, %s173
      %p175 = scmp.eq.s32.totalorder %s25, 0
      %p176 = por %p174, %p175
      %p177 = scmp.le.s32.totalorder 1, %s19
      %p178 = scmp.lt.s32.totalorder %s19, 3
      %p179 = pnand %p177, %p178
      %p180 = pneg %p179
      // Predicated region
      $region9: #{tpu_custom_call.1} parent=5 // pred_check
        _
      $region10: #{tpu_custom_call.1} parent=5 // pred_check_branch
        %182 = sbr.rel (%p179) target = $region12
      $region11: #{tpu_custom_call.1} parent=5 // pred_region
        %s183 = ssub.s32 %s19, 1
        // Predicated region
        $region13: #{tpu_custom_call.1} parent=11 // pred_check
          %p184 = pneg %p80
        $region14: #{tpu_custom_call.1} parent=11 // pred_check_branch
          %186 = sbr.rel (%p184) target = $region16
        $region15: #{tpu_custom_call.1} parent=11 // pred_region
          %s188 = ssub.s32 2048, 2048
          %189 = vsyncadd [#allocation7], %s188
          %s190 = sshll.u32 [#allocation6], 4
          %s191 = int_to_ptr.vmem [resolvable:$true] %s190
          %196 = dma.hbm_to_vmem [thread:$0]  %s1, 2048, %s191, [#allocation7], 64, 64, 4
        $region16: #{tpu_custom_call.1} parent=11 // pred_fallthru
          _
        // Predicated region
        $region17: #{tpu_custom_call.1} parent=11 // pred_check
          %p197 = pneg %p101
        $region18: #{tpu_custom_call.1} parent=11 // pred_check_branch
          %199 = sbr.rel (%p197) target = $region20
        $region19: #{tpu_custom_call.1} parent=11 // pred_region
          %s201 = ssub.s32 1024, 1024
          %202 = vsyncadd [#allocation7], %s201
          %s203 = sshll.u32 [#allocation8], 4
          %s204 = int_to_ptr.vmem [resolvable:$true] %s203
          %209 = dma.hbm_to_vmem [thread:$0]  %s2, 1024, %s204, [#allocation7], 64, 64, 4
        $region20: #{tpu_custom_call.1} parent=11 // pred_fallthru
          _
        // Predicated region
        $region21: #{tpu_custom_call.1} parent=11 // pred_check
          %p210 = pneg %p122
        $region22: #{tpu_custom_call.1} parent=11 // pred_check_branch
          %212 = sbr.rel (%p210) target = $region24
        $region23: #{tpu_custom_call.1} parent=11 // pred_region
          _
        $region24: #{tpu_custom_call.1} parent=11 // pred_fallthru
          _
        // Predicated region
        $region25: #{tpu_custom_call.1} parent=11 // pred_check
          %p213 = pneg %p143
        $region26: #{tpu_custom_call.1} parent=11 // pred_check_branch
          %215 = sbr.rel (%p213) target = $region28
        $region27: #{tpu_custom_call.1} parent=11 // pred_region
          %s217 = ssub.s32 1024, 1024
          %218 = vsyncadd [#allocation10], %s217
          %s219 = sshll.u32 [#allocation9], 4
          %s220 = int_to_ptr.vmem [resolvable:$true] %s219
          %225 = dma.hbm_to_vmem [thread:$0]  %s4, 1024, %s220, [#allocation10], 64, 64, 4
        $region28: #{tpu_custom_call.1} parent=11 // pred_fallthru
          _
      $region12: #{tpu_custom_call.1} parent=5 // pred_fallthru
        _
      %p226 = scmp.lt.s32.totalorder %s19, 2
      // Predicated region
      $region29: #{tpu_custom_call.1} parent=5 // pred_check
        %p227 = pneg %p226
      $region30: #{tpu_custom_call.1} parent=5 // pred_check_branch
        %229 = sbr.rel (%p227) target = $region32
      $region31: #{tpu_custom_call.1} parent=5 // pred_region
        // Predicated region
        $region33: #{tpu_custom_call.1} parent=31 // pred_check
          %p230 = pneg %p53
        $region34: #{tpu_custom_call.1} parent=31 // pred_check_branch
          %232 = sbr.rel (%p230) target = $region36
        $region35: #{tpu_custom_call.1} parent=31 // pred_region
          %s233 = sand.u32 %s43, 1
          %s234 = scalar_lea.sflag [#allocation4], %s233
          %s235 = sand.u32 %s43, 1
          %s236 = smul.addr %s235, 128
          %s237 = scalar_lea.vmem [#allocation3], %s236
          %s238 = smul.u32 16, %s26
          %s239 = smul.u32 2, %s27
          %s241 = ssub.s32 2048, 2048
          %242 = vsyncadd %s234, %s241
          %s243 = smul.addr %s238, 2
          %s244 = sadd.s32 %s239, %s243
          %s245 = smul.addr %s244, 64
          %s246 = scalar_lea.hbm %s0, %s245
          %s247 = sshll.u32 %s237, 4
          %s248 = int_to_ptr.vmem [resolvable:$true] %s247
          %253 = dma.hbm_to_vmem [thread:$0]  %s246, 2048, %s248, %s234, 128, 128, 8
        $region36: #{tpu_custom_call.1} parent=31 // pred_fallthru
          _
      $region32: #{tpu_custom_call.1} parent=5 // pred_fallthru
        _
      %p254 = scmp.le.s32.totalorder 1, %s19
      %p255 = scmp.lt.s32.totalorder %s19, 3
      %p256 = pnand %p254, %p255
      %p257 = pneg %p256
      // Predicated region
      $region37: #{tpu_custom_call.1} parent=5 // pred_check
        _
      $region38: #{tpu_custom_call.1} parent=5 // pred_check_branch
        %259 = sbr.rel (%p256) target = $region40
      $region39: #{tpu_custom_call.1} parent=5 // pred_region
        %s260 = ssub.s32 %s19, 1
        %s261 = sand.u32 %s46, 1
        %s262 = scalar_lea.sflag [#allocation4], %s261
        %s263 = sand.u32 %s46, 1
        %s264 = smul.addr %s263, 128
        %s265 = scalar_lea.vmem [#allocation3], %s264
        // Predicated region
        $region41: #{tpu_custom_call.1} parent=39 // pred_check
          %p266 = pneg %p59
        $region42: #{tpu_custom_call.1} parent=39 // pred_check_branch
          %268 = sbr.rel (%p266) target = $region44
        $region43: #{tpu_custom_call.1} parent=39 // pred_region
          %269 = dma.done %s262, 2048
        $region44: #{tpu_custom_call.1} parent=39 // pred_fallthru
          _
        // Predicated region
        $region45: #{tpu_custom_call.1} parent=39 // pred_check
          %p270 = pneg %p80
        $region46: #{tpu_custom_call.1} parent=39 // pred_check_branch
          %272 = sbr.rel (%p270) target = $region48
        $region47: #{tpu_custom_call.1} parent=39 // pred_region
          %273 = dma.done [#allocation7], 2048
        $region48: #{tpu_custom_call.1} parent=39 // pred_fallthru
          _
        // Predicated region
        $region49: #{tpu_custom_call.1} parent=39 // pred_check
          %p274 = pneg %p101
        $region50: #{tpu_custom_call.1} parent=39 // pred_check_branch
          %276 = sbr.rel (%p274) target = $region52
        $region51: #{tpu_custom_call.1} parent=39 // pred_region
          %277 = dma.done [#allocation7], 1024
        $region52: #{tpu_custom_call.1} parent=39 // pred_fallthru
          _
        // Predicated region
        $region53: #{tpu_custom_call.1} parent=39 // pred_check
          %p278 = pneg %p143
        $region54: #{tpu_custom_call.1} parent=39 // pred_check_branch
          %280 = sbr.rel (%p278) target = $region56
        $region55: #{tpu_custom_call.1} parent=39 // pred_region
          %281 = dma.done [#allocation10], 1024
        $region56: #{tpu_custom_call.1} parent=39 // pred_fallthru
          _
        %s282 = sand.u32 %s46, 1
        %s283 = scalar_lea.sflag [#allocation4], %s282
        %s284 = sand.u32 %s46, 1
        %s285 = smul.addr %s284, 128
        %s286 = scalar_lea.vmem [#allocation3], %s285
        %p287 = pneg %p59
        %p288 = pneg %p56
        %p289 = pneg %p80
        %p290 = pneg %p77
        %p291 = pneg %p101
        %p292 = pneg %p98
        %p293 = pneg %p122
        %p294 = pneg %p119
        %p295 = pneg %p143
        %p296 = pneg %p140
        %p297 = pneg %p169
        %p298 = pneg %p166
        %s299 = sand.u32 %s156, 1
        %s300 = scalar_lea.sflag [#allocation5], %s299
        %s301 = sand.u32 %s156, 1
        %s302 = smul.addr %s301, 64
        %s303 = scalar_lea.vmem [#allocation11], %s302
        %s304 = smul.u32 16, %s28
        %s305 = smul.u32 2, %s29
        %s306 = smul.u32 16, %s28
        %p308 = scmp.eq.s32.totalorder %s29, 0
        // Predicated region
        $region57: #{tpu_custom_call.1} parent=39 // pred_check
          %p309 = pneg %p308
        $region58: #{tpu_custom_call.1} parent=39 // pred_check_branch
          %311 = sbr.rel (%p309) target = $region60
        $region59: #{tpu_custom_call.1} parent=39 // pred_region
          %312 = vst [vmem:[#allocation2] sm:$0xff] 0.0
          %313 = vst [vmem:[#allocation2 + $0x8] sm:$0xff] 0.0
          %314 = vst [vmem:[#allocation2 + $0x10] sm:$0xff] 0.0
          %315 = vst [vmem:[#allocation2 + $0x18] sm:$0xff] 0.0
          %316 = vst [vmem:[#allocation2 + $0x20] sm:$0xff] 0.0
          %317 = vst [vmem:[#allocation2 + $0x28] sm:$0xff] 0.0
          %318 = vst [vmem:[#allocation2 + $0x30] sm:$0xff] 0.0
          %319 = vst [vmem:[#allocation2 + $0x38] sm:$0xff] 0.0
          %320 = vst [vmem:[#allocation2 + $0x40] sm:$0xff] 0.0
          %321 = vst [vmem:[#allocation2 + $0x48] sm:$0xff] 0.0
          %322 = vst [vmem:[#allocation2 + $0x50] sm:$0xff] 0.0
          %323 = vst [vmem:[#allocation2 + $0x58] sm:$0xff] 0.0
          %324 = vst [vmem:[#allocation2 + $0x60] sm:$0xff] 0.0
          %325 = vst [vmem:[#allocation2 + $0x68] sm:$0xff] 0.0
          %326 = vst [vmem:[#allocation2 + $0x70] sm:$0xff] 0.0
          %327 = vst [vmem:[#allocation2 + $0x78] sm:$0xff] 0.0
        $region60: #{tpu_custom_call.1} parent=39 // pred_fallthru
          _
        %s328 = smul.u32 %s29, 256
        %s329 = sshra.s32 %s328, 3
        %s330 = sand.u32 %s328, 7
        %s331 = smul.addr %s329, 4
        %s332 = scalar_lea.vmem [#allocation6], %s331
        %v333 = vld [vmem:[%s332] sm:$0xf]
        %v334 = vld [vmem:[%s332 + $0x4] sm:$0xf]
        %v335 = vld [vmem:[%s332 + $0x8] sm:$0xf]
        %v336 = vld [vmem:[%s332 + $0xc] sm:$0xf]
        %v337 = vld [vmem:[%s332 + $0x10] sm:$0xf]
        %v338 = vld [vmem:[%s332 + $0x14] sm:$0xf]
        %v339 = vld [vmem:[%s332 + $0x18] sm:$0xf]
        %v340 = vld [vmem:[%s332 + $0x1c] sm:$0xf]
        %v341 = vld [vmem:[%s332 + $0x20] sm:$0xf]
        %v342 = vld [vmem:[%s332 + $0x24] sm:$0xf]
        %v343 = vld [vmem:[%s332 + $0x28] sm:$0xf]
        %v344 = vld [vmem:[%s332 + $0x2c] sm:$0xf]
        %v345 = vld [vmem:[%s332 + $0x30] sm:$0xf]
        %v346 = vld [vmem:[%s332 + $0x34] sm:$0xf]
        %v347 = vld [vmem:[%s332 + $0x38] sm:$0xf]
        %v348 = vld [vmem:[%s332 + $0x3c] sm:$0xf]
        %v349 = vld [vmem:[%s332 + $0x40] sm:$0xf]
        %v350 = vld [vmem:[%s332 + $0x44] sm:$0xf]
        %v351 = vld [vmem:[%s332 + $0x48] sm:$0xf]
        %v352 = vld [vmem:[%s332 + $0x4c] sm:$0xf]
        %v353 = vld [vmem:[%s332 + $0x50] sm:$0xf]
        %v354 = vld [vmem:[%s332 + $0x54] sm:$0xf]
        %v355 = vld [vmem:[%s332 + $0x58] sm:$0xf]
        %v356 = vld [vmem:[%s332 + $0x5c] sm:$0xf]
        %v357 = vld [vmem:[%s332 + $0x60] sm:$0xf]
        %v358 = vld [vmem:[%s332 + $0x64] sm:$0xf]
        %v359 = vld [vmem:[%s332 + $0x68] sm:$0xf]
        %v360 = vld [vmem:[%s332 + $0x6c] sm:$0xf]
        %v361 = vld [vmem:[%s332 + $0x70] sm:$0xf]
        %v362 = vld [vmem:[%s332 + $0x74] sm:$0xf]
        %v363 = vld [vmem:[%s332 + $0x78] sm:$0xf]
        %v364 = vld [vmem:[%s332 + $0x7c] sm:$0xf]
        %v365 = vld [vmem:[#allocation2] sm:$0xff]
        %v366 = vld [vmem:[#allocation2 + $0x8] sm:$0xff]
        %v367 = vld [vmem:[#allocation2 + $0x10] sm:$0xff]
        %v368 = vld [vmem:[#allocation2 + $0x18] sm:$0xff]
        %v369 = vld [vmem:[#allocation2 + $0x20] sm:$0xff]
        %v370 = vld [vmem:[#allocation2 + $0x28] sm:$0xff]
        %v371 = vld [vmem:[#allocation2 + $0x30] sm:$0xff]
        %v372 = vld [vmem:[#allocation2 + $0x38] sm:$0xff]
        %v373 = vld [vmem:[#allocation2 + $0x40] sm:$0xff]
        %v374 = vld [vmem:[#allocation2 + $0x48] sm:$0xff]
        %v375 = vld [vmem:[#allocation2 + $0x50] sm:$0xff]
        %v376 = vld [vmem:[#allocation2 + $0x58] sm:$0xff]
        %v377 = vld [vmem:[#allocation2 + $0x60] sm:$0xff]
        %v378 = vld [vmem:[#allocation2 + $0x68] sm:$0xff]
        %v379 = vld [vmem:[#allocation2 + $0x70] sm:$0xff]
        %v380 = vld [vmem:[#allocation2 + $0x78] sm:$0xff]
        %v381 = vld [vmem:[%s265] sm:$0xff]
        %v382 = vld [vmem:[%s265 + $0x8] sm:$0xff]
        %v383 = vld [vmem:[%s265 + $0x10] sm:$0xff]
        %v384 = vld [vmem:[%s265 + $0x18] sm:$0xff]
        %v385 = vld [vmem:[%s265 + $0x20] sm:$0xff]
        %v386 = vld [vmem:[%s265 + $0x28] sm:$0xff]
        %v387 = vld [vmem:[%s265 + $0x30] sm:$0xff]
        %v388 = vld [vmem:[%s265 + $0x38] sm:$0xff]
        %v389 = vld [vmem:[%s265 + $0x40] sm:$0xff]
        %v390 = vld [vmem:[%s265 + $0x48] sm:$0xff]
        %v391 = vld [vmem:[%s265 + $0x50] sm:$0xff]
        %v392 = vld [vmem:[%s265 + $0x58] sm:$0xff]
        %v393 = vld [vmem:[%s265 + $0x60] sm:$0xff]
        %v394 = vld [vmem:[%s265 + $0x68] sm:$0xff]
        %v395 = vld [vmem:[%s265 + $0x70] sm:$0xff]
        %v396 = vld [vmem:[%s265 + $0x78] sm:$0xff]
        %v413 = vunpack.c.l.b16 %v381
        %v414 = vunpack.c.h.b16 %v381
        %v415 = vunpack.c.l.b16 %v382
        %v416 = vunpack.c.h.b16 %v382
        %v417 = vunpack.c.l.b16 %v383
        %v418 = vunpack.c.h.b16 %v383
        %v419 = vunpack.c.l.b16 %v384
        %v420 = vunpack.c.h.b16 %v384
        %v421 = vunpack.c.l.b16 %v385
        %v422 = vunpack.c.h.b16 %v385
        %v423 = vunpack.c.l.b16 %v386
        %v424 = vunpack.c.h.b16 %v386
        %v425 = vunpack.c.l.b16 %v387
        %v426 = vunpack.c.h.b16 %v387
        %v427 = vunpack.c.l.b16 %v388
        %v428 = vunpack.c.h.b16 %v388
        %v429 = vunpack.c.l.b16 %v389
        %v430 = vunpack.c.h.b16 %v389
        %v431 = vunpack.c.l.b16 %v390
        %v432 = vunpack.c.h.b16 %v390
        %v433 = vunpack.c.l.b16 %v391
        %v434 = vunpack.c.h.b16 %v391
        %v435 = vunpack.c.l.b16 %v392
        %v436 = vunpack.c.h.b16 %v392
        %v437 = vunpack.c.l.b16 %v393
        %v438 = vunpack.c.h.b16 %v393
        %v439 = vunpack.c.l.b16 %v394
        %v440 = vunpack.c.h.b16 %v394
        %v441 = vunpack.c.l.b16 %v395
        %v442 = vunpack.c.h.b16 %v395
        %v443 = vunpack.c.l.b16 %v396
        %v444 = vunpack.c.h.b16 %v396
        %v445 = vpack.c.b16 %v415, %v413
        %v446 = vpack.c.b16 %v416, %v414
        %v447 = vpack.c.b16 %v419, %v417
        %v448 = vpack.c.b16 %v420, %v418
        %v449 = vpack.c.b16 %v423, %v421
        %v450 = vpack.c.b16 %v424, %v422
        %v451 = vpack.c.b16 %v427, %v425
        %v452 = vpack.c.b16 %v428, %v426
        %v453 = vpack.c.b16 %v431, %v429
        %v454 = vpack.c.b16 %v432, %v430
        %v455 = vpack.c.b16 %v435, %v433
        %v456 = vpack.c.b16 %v436, %v434
        %v457 = vpack.c.b16 %v439, %v437
        %v458 = vpack.c.b16 %v440, %v438
        %v459 = vpack.c.b16 %v443, %v441
        %v460 = vpack.c.b16 %v444, %v442
        %v509 = vunpack.c.l.b16 %v333
        %v510 = vunpack.c.l.b16 %v334
        %v511 = vunpack.c.l.b16 %v335
        %v512 = vunpack.c.l.b16 %v336
        %v513 = vunpack.c.l.b16 %v337
        %v514 = vunpack.c.l.b16 %v338
        %v515 = vunpack.c.l.b16 %v339
        %v516 = vunpack.c.l.b16 %v340
        %v517 = vunpack.c.l.b16 %v341
        %v518 = vunpack.c.l.b16 %v342
        %v519 = vunpack.c.l.b16 %v343
        %v520 = vunpack.c.l.b16 %v344
        %v521 = vunpack.c.l.b16 %v345
        %v522 = vunpack.c.l.b16 %v346
        %v523 = vunpack.c.l.b16 %v347
        %v524 = vunpack.c.l.b16 %v348
        %v525 = vunpack.c.l.b16 %v349
        %v526 = vunpack.c.l.b16 %v350
        %v527 = vunpack.c.l.b16 %v351
        %v528 = vunpack.c.l.b16 %v352
        %v529 = vunpack.c.l.b16 %v353
        %v530 = vunpack.c.l.b16 %v354
        %v531 = vunpack.c.l.b16 %v355
        %v532 = vunpack.c.l.b16 %v356
        %v533 = vunpack.c.l.b16 %v357
        %v534 = vunpack.c.l.b16 %v358
        %v535 = vunpack.c.l.b16 %v359
        %v536 = vunpack.c.l.b16 %v360
        %v537 = vunpack.c.l.b16 %v361
        %v538 = vunpack.c.l.b16 %v362
        %v539 = vunpack.c.l.b16 %v363
        %v540 = vunpack.c.l.b16 %v364
        %v541 = vpack.c.b16 %v510, %v509
        %v542 = vpack.c.b16 %v512, %v511
        %v543 = vpack.c.b16 %v514, %v513
        %v544 = vpack.c.b16 %v516, %v515
        %v545 = vpack.c.b16 %v518, %v517
        %v546 = vpack.c.b16 %v520, %v519
        %v547 = vpack.c.b16 %v522, %v521
        %v548 = vpack.c.b16 %v524, %v523
        %v549 = vpack.c.b16 %v526, %v525
        %v550 = vpack.c.b16 %v528, %v527
        %v551 = vpack.c.b16 %v530, %v529
        %v552 = vpack.c.b16 %v532, %v531
        %v553 = vpack.c.b16 %v534, %v533
        %v554 = vpack.c.b16 %v536, %v535
        %v555 = vpack.c.b16 %v538, %v537
        %v556 = vpack.c.b16 %v540, %v539
        %573 = vmatprep.subr.bf16.mxu0 0
        %574 = vmatpush1.bf16.msra.mxu0 %v541
        %575 = vmatprep.subr.bf16.mxu0 0
        %576 = vmatpush1.bf16.msra.mxu0 %v542
        %577 = vmatprep.subr.bf16.mxu0 0
        %578 = vmatpush1.bf16.msra.mxu0 %v543
        %579 = vmatprep.subr.bf16.mxu0 0
        %580 = vmatpush1.bf16.msra.mxu0 %v544
        %581 = vmatprep.subr.bf16.mxu0 0
        %582 = vmatpush1.bf16.msra.mxu0 %v545
        %583 = vmatprep.subr.bf16.mxu0 0
        %584 = vmatpush1.bf16.msra.mxu0 %v546
        %585 = vmatprep.subr.bf16.mxu0 0
        %586 = vmatpush1.bf16.msra.mxu0 %v547
        %587 = vmatprep.subr.bf16.mxu0 0
        %588 = vmatpush1.bf16.msra.mxu0 %v548
        %589 = vmatprep.subr.bf16.mxu0 0
        %590 = vmatpush1.bf16.msra.mxu0 %v549
        %591 = vmatprep.subr.bf16.mxu0 0
        %592 = vmatpush1.bf16.msra.mxu0 %v550
        %593 = vmatprep.subr.bf16.mxu0 0
        %594 = vmatpush1.bf16.msra.mxu0 %v551
        %595 = vmatprep.subr.bf16.mxu0 0
        %596 = vmatpush1.bf16.msra.mxu0 %v552
        %597 = vmatprep.subr.bf16.mxu0 0
        %598 = vmatpush1.bf16.msra.mxu0 %v553
        %599 = vmatprep.subr.bf16.mxu0 0
        %600 = vmatpush1.bf16.msra.mxu0 %v554
        %601 = vmatprep.subr.bf16.mxu0 0
        %602 = vmatpush1.bf16.msra.mxu0 %v555
        %603 = vmatprep.subr.bf16.mxu0 0
        %604 = vmatpush1.bf16.msra.mxu0 %v556
        %605 = vmatprep.mubr.bf16.mxu0 %v446
        %606 = vmatmul.mubr.bf16.gmra.mrb[0].mxu0 %v445
        %v607 = vpop.f32.mrb[0].mxu0
        %v608 = vadd.f32 0.0, %v607
        %v609 = vpop.f32.mrb[0].mxu0
        %v610 = vpop.f32.mrb[0].mxu0
        %v611 = vadd.f32 0.0, %v610
        %v612 = vpop.f32.mrb[0].mxu0
        %613 = vmatprep.mubr.bf16.mxu0 %v448
        %614 = vmatmul.mubr.bf16.gmra.mrb[0].mxu0 %v447
        %v615 = vpop.f32.mrb[0].mxu0
        %v616 = vadd.f32 0.0, %v615
        %v617 = vpop.f32.mrb[0].mxu0
        %v618 = vpop.f32.mrb[0].mxu0
        %v619 = vadd.f32 0.0, %v618
        %v620 = vpop.f32.mrb[0].mxu0
        %621 = vmatprep.mubr.bf16.mxu0 %v450
        %622 = vmatmul.mubr.bf16.gmra.mrb[0].mxu0 %v449
        %v623 = vpop.f32.mrb[0].mxu0
        %v624 = vadd.f32 0.0, %v623
        %v625 = vpop.f32.mrb[0].mxu0
        %v626 = vpop.f32.mrb[0].mxu0
        %v627 = vadd.f32 0.0, %v626
        %v628 = vpop.f32.mrb[0].mxu0
        %629 = vmatprep.mubr.bf16.mxu0 %v452
        %630 = vmatmul.mubr.bf16.gmra.mrb[0].mxu0 %v451
        %v631 = vpop.f32.mrb[0].mxu0
        %v632 = vadd.f32 0.0, %v631
        %v633 = vpop.f32.mrb[0].mxu0
        %v634 = vpop.f32.mrb[0].mxu0
        %v635 = vadd.f32 0.0, %v634
        %v636 = vpop.f32.mrb[0].mxu0
        %637 = vmatprep.mubr.bf16.mxu0 %v454
        %638 = vmatmul.mubr.bf16.gmra.mrb[0].mxu0 %v453
        %v639 = vpop.f32.mrb[0].mxu0
        %v640 = vadd.f32 0.0, %v639
        %v641 = vpop.f32.mrb[0].mxu0
        %v642 = vpop.f32.mrb[0].mxu0
        %v643 = vadd.f32 0.0, %v642
        %v644 = vpop.f32.mrb[0].mxu0
        %645 = vmatprep.mubr.bf16.mxu0 %v456
        %646 = vmatmul.mubr.bf16.gmra.mrb[0].mxu0 %v455
        %v647 = vpop.f32.mrb[0].mxu0
        %v648 = vadd.f32 0.0, %v647
        %v649 = vpop.f32.mrb[0].mxu0
        %v650 = vpop.f32.mrb[0].mxu0
        %v651 = vadd.f32 0.0, %v650
        %v652 = vpop.f32.mrb[0].mxu0
        %653 = vmatprep.mubr.bf16.mxu0 %v458
        %654 = vmatmul.mubr.bf16.gmra.mrb[0].mxu0 %v457
        %v655 = vpop.f32.mrb[0].mxu0
        %v656 = vadd.f32 0.0, %v655
        %v657 = vpop.f32.mrb[0].mxu0
        %v658 = vpop.f32.mrb[0].mxu0
        %v659 = vadd.f32 0.0, %v658
        %v660 = vpop.f32.mrb[0].mxu0
        %661 = vmatprep.mubr.bf16.mxu0 %v460
        %662 = vmatmul.mubr.bf16.gmra.mrb[0].mxu0 %v459
        %v663 = vpop.f32.mrb[0].mxu0
        %v664 = vadd.f32 0.0, %v663
        %v665 = vpop.f32.mrb[0].mxu0
        %v666 = vpop.f32.mrb[0].mxu0
        %v667 = vadd.f32 0.0, %v666
        %v668 = vpop.f32.mrb[0].mxu0
        %669 = vdwg.mxu0
        %v670 = vadd.f32 %v365, %v608
        %v671 = vadd.f32 %v366, %v611
        %v672 = vadd.f32 %v367, %v616
        %v673 = vadd.f32 %v368, %v619
        %v674 = vadd.f32 %v369, %v624
        %v675 = vadd.f32 %v370, %v627
        %v676 = vadd.f32 %v371, %v632
        %v677 = vadd.f32 %v372, %v635
        %v678 = vadd.f32 %v373, %v640
        %v679 = vadd.f32 %v374, %v643
        %v680 = vadd.f32 %v375, %v648
        %v681 = vadd.f32 %v376, %v651
        %v682 = vadd.f32 %v377, %v656
        %v683 = vadd.f32 %v378, %v659
        %v684 = vadd.f32 %v379, %v664
        %v685 = vadd.f32 %v380, %v667
        %686 = vst [vmem:[#allocation2] sm:$0xff] %v670
        %687 = vst [vmem:[#allocation2 + $0x8] sm:$0xff] %v671
        %688 = vst [vmem:[#allocation2 + $0x10] sm:$0xff] %v672
        %689 = vst [vmem:[#allocation2 + $0x18] sm:$0xff] %v673
        %690 = vst [vmem:[#allocation2 + $0x20] sm:$0xff] %v674
        %691 = vst [vmem:[#allocation2 + $0x28] sm:$0xff] %v675
        %692 = vst [vmem:[#allocation2 + $0x30] sm:$0xff] %v676
        %693 = vst [vmem:[#allocation2 + $0x38] sm:$0xff] %v677
        %694 = vst [vmem:[#allocation2 + $0x40] sm:$0xff] %v678
        %695 = vst [vmem:[#allocation2 + $0x48] sm:$0xff] %v679
        %696 = vst [vmem:[#allocation2 + $0x50] sm:$0xff] %v680
        %697 = vst [vmem:[#allocation2 + $0x58] sm:$0xff] %v681
        %698 = vst [vmem:[#allocation2 + $0x60] sm:$0xff] %v682
        %699 = vst [vmem:[#allocation2 + $0x68] sm:$0xff] %v683
        %700 = vst [vmem:[#allocation2 + $0x70] sm:$0xff] %v684
        %701 = vst [vmem:[#allocation2 + $0x78] sm:$0xff] %v685
        // Predicated region
        $region61: #{tpu_custom_call.1} parent=39 // pred_check
          %p702 = pneg %p308
        $region62: #{tpu_custom_call.1} parent=39 // pred_check_branch
          %704 = sbr.rel (%p702) target = $region64
        $region63: #{tpu_custom_call.1} parent=39 // pred_region
          %v705 = vld [vmem:[#allocation2] sm:$0xff]
          %v706 = vld [vmem:[#allocation2 + $0x8] sm:$0xff]
          %v707 = vld [vmem:[#allocation2 + $0x10] sm:$0xff]
          %v708 = vld [vmem:[#allocation2 + $0x18] sm:$0xff]
          %v709 = vld [vmem:[#allocation2 + $0x20] sm:$0xff]
          %v710 = vld [vmem:[#allocation2 + $0x28] sm:$0xff]
          %v711 = vld [vmem:[#allocation2 + $0x30] sm:$0xff]
          %v712 = vld [vmem:[#allocation2 + $0x38] sm:$0xff]
          %v713 = vld [vmem:[#allocation2 + $0x40] sm:$0xff]
          %v714 = vld [vmem:[#allocation2 + $0x48] sm:$0xff]
          %v715 = vld [vmem:[#allocation2 + $0x50] sm:$0xff]
          %v716 = vld [vmem:[#allocation2 + $0x58] sm:$0xff]
          %v717 = vld [vmem:[#allocation2 + $0x60] sm:$0xff]
          %v718 = vld [vmem:[#allocation2 + $0x68] sm:$0xff]
          %v719 = vld [vmem:[#allocation2 + $0x70] sm:$0xff]
          %v720 = vld [vmem:[#allocation2 + $0x78] sm:$0xff]
          %v721 = vpack.c.bf16 %v706, %v705
          %v722 = vpack.c.bf16 %v708, %v707
          %v723 = vpack.c.bf16 %v710, %v709
          %v724 = vpack.c.bf16 %v712, %v711
          %v725 = vpack.c.bf16 %v714, %v713
          %v726 = vpack.c.bf16 %v716, %v715
          %v727 = vpack.c.bf16 %v718, %v717
          %v728 = vpack.c.bf16 %v720, %v719
          %v729 = vld [vmem:[#allocation8] sm:$0xf]
          %v730 = vld [vmem:[#allocation8 + $0x4] sm:$0xf]
          %v731 = vld [vmem:[#allocation8 + $0x8] sm:$0xf]
          %v732 = vld [vmem:[#allocation8 + $0xc] sm:$0xf]
          %v733 = vld [vmem:[#allocation8 + $0x10] sm:$0xf]
          %v734 = vld [vmem:[#allocation8 + $0x14] sm:$0xf]
          %v735 = vld [vmem:[#allocation8 + $0x18] sm:$0xf]
          %v736 = vld [vmem:[#allocation8 + $0x1c] sm:$0xf]
          %v737 = vld [vmem:[#allocation8 + $0x20] sm:$0xf]
          %v738 = vld [vmem:[#allocation8 + $0x24] sm:$0xf]
          %v739 = vld [vmem:[#allocation8 + $0x28] sm:$0xf]
          %v740 = vld [vmem:[#allocation8 + $0x2c] sm:$0xf]
          %v741 = vld [vmem:[#allocation8 + $0x30] sm:$0xf]
          %v742 = vld [vmem:[#allocation8 + $0x34] sm:$0xf]
          %v743 = vld [vmem:[#allocation8 + $0x38] sm:$0xf]
          %v744 = vld [vmem:[#allocation8 + $0x3c] sm:$0xf]
          %v745 = vld [vmem:[%s3] sm:$0x1]
          %v747 = vlaneseq
          %v748 = vshrl.u32 %v747, 7
          %v749 = vsub.s32 0, %v748
          %v750 = vrot.slane %v745, %v749
          %v768 = vunpack.c.l.b16 %v729
          %v769 = vunpack.c.l.b16 %v730
          %v770 = vunpack.c.l.b16 %v731
          %v771 = vunpack.c.l.b16 %v732
          %v772 = vunpack.c.l.b16 %v733
          %v773 = vunpack.c.l.b16 %v734
          %v774 = vunpack.c.l.b16 %v735
          %v775 = vunpack.c.l.b16 %v736
          %v776 = vunpack.c.l.b16 %v737
          %v777 = vunpack.c.l.b16 %v738
          %v778 = vunpack.c.l.b16 %v739
          %v779 = vunpack.c.l.b16 %v740
          %v780 = vunpack.c.l.b16 %v741
          %v781 = vunpack.c.l.b16 %v742
          %v782 = vunpack.c.l.b16 %v743
          %v783 = vunpack.c.l.b16 %v744
          %v784 = vpack.c.b16 %v769, %v768
          %v785 = vpack.c.b16 %v771, %v770
          %v786 = vpack.c.b16 %v773, %v772
          %v787 = vpack.c.b16 %v775, %v774
          %v788 = vpack.c.b16 %v777, %v776
          %v789 = vpack.c.b16 %v779, %v778
          %v790 = vpack.c.b16 %v781, %v780
          %v791 = vpack.c.b16 %v783, %v782
          %800 = vmatprep.subr.bf16.mxu0 0
          %801 = vmatpush1.bf16.msra.mxu0 %v784
          %802 = vmatprep.subr.bf16.mxu0 0
          %803 = vmatpush1.bf16.msra.mxu0 %v785
          %804 = vmatprep.subr.bf16.mxu0 0
          %805 = vmatpush1.bf16.msra.mxu0 %v786
          %806 = vmatprep.subr.bf16.mxu0 0
          %807 = vmatpush1.bf16.msra.mxu0 %v787
          %808 = vmatprep.subr.bf16.mxu0 0
          %809 = vmatpush1.bf16.msra.mxu0 %v788
          %810 = vmatprep.subr.bf16.mxu0 0
          %811 = vmatpush1.bf16.msra.mxu0 %v789
          %812 = vmatprep.subr.bf16.mxu0 0
          %813 = vmatpush1.bf16.msra.mxu0 %v790
          %814 = vmatprep.subr.bf16.mxu0 0
          %815 = vmatpush1.bf16.msra.mxu0 %v791
          %816 = vmatprep.subr.bf16.mxu0 0
          %817 = vmatpush1.bf16.msra.mxu0 0
          %818 = vmatprep.subr.bf16.mxu0 0
          %819 = vmatpush1.bf16.msra.mxu0 0
          %820 = vmatprep.subr.bf16.mxu0 0
          %821 = vmatpush1.bf16.msra.mxu0 0
          %822 = vmatprep.subr.bf16.mxu0 0
          %823 = vmatpush1.bf16.msra.mxu0 0
          %824 = vmatprep.subr.bf16.mxu0 0
          %825 = vmatpush1.bf16.msra.mxu0 0
          %826 = vmatprep.subr.bf16.mxu0 0
          %827 = vmatpush1.bf16.msra.mxu0 0
          %828 = vmatprep.subr.bf16.mxu0 0
          %829 = vmatpush1.bf16.msra.mxu0 0
          %830 = vmatprep.subr.bf16.mxu0 0
          %831 = vmatpush1.bf16.msra.mxu0 0
          %832 = vmatprep.mubr.bf16.mxu0 0
          %833 = vmatmul.mubr.bf16.gmra.mrb[0].mxu0 %v721
          %v834 = vpop.f32.mrb[0].mxu0
          %v835 = vadd.f32 %v750, %v834
          %v836 = vpop.f32.mrb[0].mxu0
          %v837 = vpop.f32.mrb[0].mxu0
          %v838 = vadd.f32 %v750, %v837
          %v839 = vpop.f32.mrb[0].mxu0
          %840 = vmatprep.mubr.bf16.mxu0 0
          %841 = vmatmul.mubr.bf16.gmra.mrb[0].mxu0 %v722
          %v842 = vpop.f32.mrb[0].mxu0
          %v843 = vadd.f32 %v750, %v842
          %v844 = vpop.f32.mrb[0].mxu0
          %v845 = vpop.f32.mrb[0].mxu0
          %v846 = vadd.f32 %v750, %v845
          %v847 = vpop.f32.mrb[0].mxu0
          %848 = vmatprep.mubr.bf16.mxu0 0
          %849 = vmatmul.mubr.bf16.gmra.mrb[0].mxu0 %v723
          %v850 = vpop.f32.mrb[0].mxu0
          %v851 = vadd.f32 %v750, %v850
          %v852 = vpop.f32.mrb[0].mxu0
          %v853 = vpop.f32.mrb[0].mxu0
          %v854 = vadd.f32 %v750, %v853
          %v855 = vpop.f32.mrb[0].mxu0
          %856 = vmatprep.mubr.bf16.mxu0 0
          %857 = vmatmul.mubr.bf16.gmra.mrb[0].mxu0 %v724
          %v858 = vpop.f32.mrb[0].mxu0
          %v859 = vadd.f32 %v750, %v858
          %v860 = vpop.f32.mrb[0].mxu0
          %v861 = vpop.f32.mrb[0].mxu0
          %v862 = vadd.f32 %v750, %v861
          %v863 = vpop.f32.mrb[0].mxu0
          %864 = vmatprep.mubr.bf16.mxu0 0
          %865 = vmatmul.mubr.bf16.gmra.mrb[0].mxu0 %v725
          %v866 = vpop.f32.mrb[0].mxu0
          %v867 = vadd.f32 %v750, %v866
          %v868 = vpop.f32.mrb[0].mxu0
          %v869 = vpop.f32.mrb[0].mxu0
          %v870 = vadd.f32 %v750, %v869
          %v871 = vpop.f32.mrb[0].mxu0
          %872 = vmatprep.mubr.bf16.mxu0 0
          %873 = vmatmul.mubr.bf16.gmra.mrb[0].mxu0 %v726
          %v874 = vpop.f32.mrb[0].mxu0
          %v875 = vadd.f32 %v750, %v874
          %v876 = vpop.f32.mrb[0].mxu0
          %v877 = vpop.f32.mrb[0].mxu0
          %v878 = vadd.f32 %v750, %v877
          %v879 = vpop.f32.mrb[0].mxu0
          %880 = vmatprep.mubr.bf16.mxu0 0
          %881 = vmatmul.mubr.bf16.gmra.mrb[0].mxu0 %v727
          %v882 = vpop.f32.mrb[0].mxu0
          %v883 = vadd.f32 %v750, %v882
          %v884 = vpop.f32.mrb[0].mxu0
          %v885 = vpop.f32.mrb[0].mxu0
          %v886 = vadd.f32 %v750, %v885
          %v887 = vpop.f32.mrb[0].mxu0
          %888 = vmatprep.mubr.bf16.mxu0 0
          %889 = vmatmul.mubr.bf16.gmra.mrb[0].mxu0 %v728
          %v890 = vpop.f32.mrb[0].mxu0
          %v891 = vadd.f32 %v750, %v890
          %v892 = vpop.f32.mrb[0].mxu0
          %v893 = vpop.f32.mrb[0].mxu0
          %v894 = vadd.f32 %v750, %v893
          %v895 = vpop.f32.mrb[0].mxu0
          %896 = vdwg.mxu0
          %vm897 = vcmp.gt.f32.partialorder %v835, 0.0
          %vm898 = vcmp.gt.f32.partialorder %v838, 0.0
          %vm899 = vcmp.gt.f32.partialorder %v843, 0.0
          %vm900 = vcmp.gt.f32.partialorder %v846, 0.0
          %vm901 = vcmp.gt.f32.partialorder %v851, 0.0
          %vm902 = vcmp.gt.f32.partialorder %v854, 0.0
          %vm903 = vcmp.gt.f32.partialorder %v859, 0.0
          %vm904 = vcmp.gt.f32.partialorder %v862, 0.0
          %vm905 = vcmp.gt.f32.partialorder %v867, 0.0
          %vm906 = vcmp.gt.f32.partialorder %v870, 0.0
          %vm907 = vcmp.gt.f32.partialorder %v875, 0.0
          %vm908 = vcmp.gt.f32.partialorder %v878, 0.0
          %vm909 = vcmp.gt.f32.partialorder %v883, 0.0
          %vm910 = vcmp.gt.f32.partialorder %v886, 0.0
          %vm911 = vcmp.gt.f32.partialorder %v891, 0.0
          %vm912 = vcmp.gt.f32.partialorder %v894, 0.0
          %v913 = vmul.f32 %v835, 0.01
          %v914 = vmul.f32 %v838, 0.01
          %v915 = vmul.f32 %v843, 0.01
          %v916 = vmul.f32 %v846, 0.01
          %v917 = vmul.f32 %v851, 0.01
          %v918 = vmul.f32 %v854, 0.01
          %v919 = vmul.f32 %v859, 0.01
          %v920 = vmul.f32 %v862, 0.01
          %v921 = vmul.f32 %v867, 0.01
          %v922 = vmul.f32 %v870, 0.01
          %v923 = vmul.f32 %v875, 0.01
          %v924 = vmul.f32 %v878, 0.01
          %v925 = vmul.f32 %v883, 0.01
          %v926 = vmul.f32 %v886, 0.01
          %v927 = vmul.f32 %v891, 0.01
          %v928 = vmul.f32 %v894, 0.01
          %v929 = vsel %vm897, %v835, %v913
          %v930 = vsel %vm898, %v838, %v914
          %v931 = vsel %vm899, %v843, %v915
          %v932 = vsel %vm900, %v846, %v916
          %v933 = vsel %vm901, %v851, %v917
          %v934 = vsel %vm902, %v854, %v918
          %v935 = vsel %vm903, %v859, %v919
          %v936 = vsel %vm904, %v862, %v920
          %v937 = vsel %vm905, %v867, %v921
          %v938 = vsel %vm906, %v870, %v922
          %v939 = vsel %vm907, %v875, %v923
          %v940 = vsel %vm908, %v878, %v924
          %v941 = vsel %vm909, %v883, %v925
          %v942 = vsel %vm910, %v886, %v926
          %v943 = vsel %vm911, %v891, %v927
          %v944 = vsel %vm912, %v894, %v928
          %v945 = vpack.c.bf16 %v930, %v929
          %v946 = vpack.c.bf16 %v932, %v931
          %v947 = vpack.c.bf16 %v934, %v933
          %v948 = vpack.c.bf16 %v936, %v935
          %v949 = vpack.c.bf16 %v938, %v937
          %v950 = vpack.c.bf16 %v940, %v939
          %v951 = vpack.c.bf16 %v942, %v941
          %v952 = vpack.c.bf16 %v944, %v943
          %v953 = vld [vmem:[#allocation9] sm:$0xf]
          %v954 = vld [vmem:[#allocation9 + $0x4] sm:$0xf]
          %v955 = vld [vmem:[#allocation9 + $0x8] sm:$0xf]
          %v956 = vld [vmem:[#allocation9 + $0xc] sm:$0xf]
          %v957 = vld [vmem:[#allocation9 + $0x10] sm:$0xf]
          %v958 = vld [vmem:[#allocation9 + $0x14] sm:$0xf]
          %v959 = vld [vmem:[#allocation9 + $0x18] sm:$0xf]
          %v960 = vld [vmem:[#allocation9 + $0x1c] sm:$0xf]
          %v961 = vld [vmem:[#allocation9 + $0x20] sm:$0xf]
          %v962 = vld [vmem:[#allocation9 + $0x24] sm:$0xf]
          %v963 = vld [vmem:[#allocation9 + $0x28] sm:$0xf]
          %v964 = vld [vmem:[#allocation9 + $0x2c] sm:$0xf]
          %v965 = vld [vmem:[#allocation9 + $0x30] sm:$0xf]
          %v966 = vld [vmem:[#allocation9 + $0x34] sm:$0xf]
          %v967 = vld [vmem:[#allocation9 + $0x38] sm:$0xf]
          %v968 = vld [vmem:[#allocation9 + $0x3c] sm:$0xf]
          %v985 = vunpack.c.l.b16 %v953
          %v986 = vunpack.c.l.b16 %v954
          %v987 = vunpack.c.l.b16 %v955
          %v988 = vunpack.c.l.b16 %v956
          %v989 = vunpack.c.l.b16 %v957
          %v990 = vunpack.c.l.b16 %v958
          %v991 = vunpack.c.l.b16 %v959
          %v992 = vunpack.c.l.b16 %v960
          %v993 = vunpack.c.l.b16 %v961
          %v994 = vunpack.c.l.b16 %v962
          %v995 = vunpack.c.l.b16 %v963
          %v996 = vunpack.c.l.b16 %v964
          %v997 = vunpack.c.l.b16 %v965
          %v998 = vunpack.c.l.b16 %v966
          %v999 = vunpack.c.l.b16 %v967
          %v1000 = vunpack.c.l.b16 %v968
          %v1001 = vpack.c.b16 %v986, %v985
          %v1002 = vpack.c.b16 %v988, %v987
          %v1003 = vpack.c.b16 %v990, %v989
          %v1004 = vpack.c.b16 %v992, %v991
          %v1005 = vpack.c.b16 %v994, %v993
          %v1006 = vpack.c.b16 %v996, %v995
          %v1007 = vpack.c.b16 %v998, %v997
          %v1008 = vpack.c.b16 %v1000, %v999
          %1017 = vmatprep.subr.bf16.mxu0 0
          %1018 = vmatpush1.bf16.msra.mxu0 %v1001
          %1019 = vmatprep.subr.bf16.mxu0 0
          %1020 = vmatpush1.bf16.msra.mxu0 %v1002
          %1021 = vmatprep.subr.bf16.mxu0 0
          %1022 = vmatpush1.bf16.msra.mxu0 %v1003
          %1023 = vmatprep.subr.bf16.mxu0 0
          %1024 = vmatpush1.bf16.msra.mxu0 %v1004
          %1025 = vmatprep.subr.bf16.mxu0 0
          %1026 = vmatpush1.bf16.msra.mxu0 %v1005
          %1027 = vmatprep.subr.bf16.mxu0 0
          %1028 = vmatpush1.bf16.msra.mxu0 %v1006
          %1029 = vmatprep.subr.bf16.mxu0 0
          %1030 = vmatpush1.bf16.msra.mxu0 %v1007
          %1031 = vmatprep.subr.bf16.mxu0 0
          %1032 = vmatpush1.bf16.msra.mxu0 %v1008
          %1033 = vmatprep.subr.bf16.mxu0 0
          %1034 = vmatpush1.bf16.msra.mxu0 0
          %1035 = vmatprep.subr.bf16.mxu0 0
          %1036 = vmatpush1.bf16.msra.mxu0 0
          %1037 = vmatprep.subr.bf16.mxu0 0
          %1038 = vmatpush1.bf16.msra.mxu0 0
          %1039 = vmatprep.subr.bf16.mxu0 0
          %1040 = vmatpush1.bf16.msra.mxu0 0
          %1041 = vmatprep.subr.bf16.mxu0 0
          %1042 = vmatpush1.bf16.msra.mxu0 0
          %1043 = vmatprep.subr.bf16.mxu0 0
          %1044 = vmatpush1.bf16.msra.mxu0 0
          %1045 = vmatprep.subr.bf16.mxu0 0
          %1046 = vmatpush1.bf16.msra.mxu0 0
          %1047 = vmatprep.subr.bf16.mxu0 0
          %1048 = vmatpush1.bf16.msra.mxu0 0
          %1049 = vmatprep.mubr.bf16.mxu0 0
          %1050 = vmatmul.mubr.bf16.gmra.mrb[0].mxu0 %v945
          %v1051 = vpop.f32.mrb[0].mxu0
          %v1052 = vadd.f32 0.0, %v1051
          %v1053 = vpop.f32.mrb[0].mxu0
          %v1054 = vpop.f32.mrb[0].mxu0
          %v1055 = vadd.f32 0.0, %v1054
          %v1056 = vpop.f32.mrb[0].mxu0
          %1057 = vmatprep.mubr.bf16.mxu0 0
          %1058 = vmatmul.mubr.bf16.gmra.mrb[0].mxu0 %v946
          %v1059 = vpop.f32.mrb[0].mxu0
          %v1060 = vadd.f32 0.0, %v1059
          %v1061 = vpop.f32.mrb[0].mxu0
          %v1062 = vpop.f32.mrb[0].mxu0
          %v1063 = vadd.f32 0.0, %v1062
          %v1064 = vpop.f32.mrb[0].mxu0
          %1065 = vmatprep.mubr.bf16.mxu0 0
          %1066 = vmatmul.mubr.bf16.gmra.mrb[0].mxu0 %v947
          %v1067 = vpop.f32.mrb[0].mxu0
          %v1068 = vadd.f32 0.0, %v1067
          %v1069 = vpop.f32.mrb[0].mxu0
          %v1070 = vpop.f32.mrb[0].mxu0
          %v1071 = vadd.f32 0.0, %v1070
          %v1072 = vpop.f32.mrb[0].mxu0
          %1073 = vmatprep.mubr.bf16.mxu0 0
          %1074 = vmatmul.mubr.bf16.gmra.mrb[0].mxu0 %v948
          %v1075 = vpop.f32.mrb[0].mxu0
          %v1076 = vadd.f32 0.0, %v1075
          %v1077 = vpop.f32.mrb[0].mxu0
          %v1078 = vpop.f32.mrb[0].mxu0
          %v1079 = vadd.f32 0.0, %v1078
          %v1080 = vpop.f32.mrb[0].mxu0
          %1081 = vmatprep.mubr.bf16.mxu0 0
          %1082 = vmatmul.mubr.bf16.gmra.mrb[0].mxu0 %v949
          %v1083 = vpop.f32.mrb[0].mxu0
          %v1084 = vadd.f32 0.0, %v1083
          %v1085 = vpop.f32.mrb[0].mxu0
          %v1086 = vpop.f32.mrb[0].mxu0
          %v1087 = vadd.f32 0.0, %v1086
          %v1088 = vpop.f32.mrb[0].mxu0
          %1089 = vmatprep.mubr.bf16.mxu0 0
          %1090 = vmatmul.mubr.bf16.gmra.mrb[0].mxu0 %v950
          %v1091 = vpop.f32.mrb[0].mxu0
          %v1092 = vadd.f32 0.0, %v1091
          %v1093 = vpop.f32.mrb[0].mxu0
          %v1094 = vpop.f32.mrb[0].mxu0
          %v1095 = vadd.f32 0.0, %v1094
          %v1096 = vpop.f32.mrb[0].mxu0
          %1097 = vmatprep.mubr.bf16.mxu0 0
          %1098 = vmatmul.mubr.bf16.gmra.mrb[0].mxu0 %v951
          %v1099 = vpop.f32.mrb[0].mxu0
          %v1100 = vadd.f32 0.0, %v1099
          %v1101 = vpop.f32.mrb[0].mxu0
          %v1102 = vpop.f32.mrb[0].mxu0
          %v1103 = vadd.f32 0.0, %v1102
          %v1104 = vpop.f32.mrb[0].mxu0
          %1105 = vmatprep.mubr.bf16.mxu0 0
          %1106 = vmatmul.mubr.bf16.gmra.mrb[0].mxu0 %v952
          %v1107 = vpop.f32.mrb[0].mxu0
          %v1108 = vadd.f32 0.0, %v1107
          %v1109 = vpop.f32.mrb[0].mxu0
          %v1110 = vpop.f32.mrb[0].mxu0
          %v1111 = vadd.f32 0.0, %v1110
          %v1112 = vpop.f32.mrb[0].mxu0
          %1113 = vdwg.mxu0
          %v1114 = vpack.c.bf16 %v1055, %v1052
          %v1115 = vpack.c.bf16 %v1063, %v1060
          %v1116 = vpack.c.bf16 %v1071, %v1068
          %v1117 = vpack.c.bf16 %v1079, %v1076
          %v1118 = vpack.c.bf16 %v1087, %v1084
          %v1119 = vpack.c.bf16 %v1095, %v1092
          %v1120 = vpack.c.bf16 %v1103, %v1100
          %v1121 = vpack.c.bf16 %v1111, %v1108
          %v1130 = vunpack.c.l.b16 %v1114
          %v1131 = vunpack.c.h.b16 %v1114
          %v1132 = vunpack.c.l.b16 %v1115
          %v1133 = vunpack.c.h.b16 %v1115
          %v1134 = vunpack.c.l.b16 %v1116
          %v1135 = vunpack.c.h.b16 %v1116
          %v1136 = vunpack.c.l.b16 %v1117
          %v1137 = vunpack.c.h.b16 %v1117
          %v1138 = vunpack.c.l.b16 %v1118
          %v1139 = vunpack.c.h.b16 %v1118
          %v1140 = vunpack.c.l.b16 %v1119
          %v1141 = vunpack.c.h.b16 %v1119
          %v1142 = vunpack.c.l.b16 %v1120
          %v1143 = vunpack.c.h.b16 %v1120
          %v1144 = vunpack.c.l.b16 %v1121
          %v1145 = vunpack.c.h.b16 %v1121
          %v1146 = vpack.c.b16 %v1130, %v1130
          %v1147 = vpack.c.b16 %v1131, %v1131
          %v1148 = vpack.c.b16 %v1132, %v1132
          %v1149 = vpack.c.b16 %v1133, %v1133
          %v1150 = vpack.c.b16 %v1134, %v1134
          %v1151 = vpack.c.b16 %v1135, %v1135
          %v1152 = vpack.c.b16 %v1136, %v1136
          %v1153 = vpack.c.b16 %v1137, %v1137
          %v1154 = vpack.c.b16 %v1138, %v1138
          %v1155 = vpack.c.b16 %v1139, %v1139
          %v1156 = vpack.c.b16 %v1140, %v1140
          %v1157 = vpack.c.b16 %v1141, %v1141
          %v1158 = vpack.c.b16 %v1142, %v1142
          %v1159 = vpack.c.b16 %v1143, %v1143
          %v1160 = vpack.c.b16 %v1144, %v1144
          %v1161 = vpack.c.b16 %v1145, %v1145
          %1178 = vst [vmem:[%s303] sm:$0xf] %v1146
          %1179 = vst [vmem:[%s303 + $0x4] sm:$0xf] %v1147
          %1180 = vst [vmem:[%s303 + $0x8] sm:$0xf] %v1148
          %1181 = vst [vmem:[%s303 + $0xc] sm:$0xf] %v1149
          %1182 = vst [vmem:[%s303 + $0x10] sm:$0xf] %v1150
          %1183 = vst [vmem:[%s303 + $0x14] sm:$0xf] %v1151
          %1184 = vst [vmem:[%s303 + $0x18] sm:$0xf] %v1152
          %1185 = vst [vmem:[%s303 + $0x1c] sm:$0xf] %v1153
          %1186 = vst [vmem:[%s303 + $0x20] sm:$0xf] %v1154
          %1187 = vst [vmem:[%s303 + $0x24] sm:$0xf] %v1155
          %1188 = vst [vmem:[%s303 + $0x28] sm:$0xf] %v1156
          %1189 = vst [vmem:[%s303 + $0x2c] sm:$0xf] %v1157
          %1190 = vst [vmem:[%s303 + $0x30] sm:$0xf] %v1158
          %1191 = vst [vmem:[%s303 + $0x34] sm:$0xf] %v1159
          %1192 = vst [vmem:[%s303 + $0x38] sm:$0xf] %v1160
          %1193 = vst [vmem:[%s303 + $0x3c] sm:$0xf] %v1161
        $region64: #{tpu_custom_call.1} parent=39 // pred_fallthru
          _
        %s1194 = sand.u32 %s156, 1
        %s1195 = scalar_lea.sflag [#allocation5], %s1194
        %s1196 = sand.u32 %s156, 1
        %s1197 = smul.addr %s1196, 64
        %s1198 = scalar_lea.vmem [#allocation11], %s1197
        // Predicated region
        $region65: #{tpu_custom_call.1} parent=39 // pred_check
          %p1199 = pneg %p166
        $region66: #{tpu_custom_call.1} parent=39 // pred_check_branch
          %1201 = sbr.rel (%p1199) target = $region68
        $region67: #{tpu_custom_call.1} parent=39 // pred_region
          %s1202 = smul.u32 16, %s28
          %s1204 = ssub.s32 1024, 1024
          %1205 = vsyncadd %s1195, %s1204
          %s1206 = smul.addr %s1202, 64
          %s1207 = scalar_lea.hbm %s5, %s1206
          %s1208 = sshll.u32 %s1198, 4
          %s1209 = int_to_ptr.vmem [resolvable:$true] %s1208
          %1214 = dma.vmem_to_hbm [thread:$0]  %s1209, 1024, %s1207, %s1195, 64, 64, 4
        $region68: #{tpu_custom_call.1} parent=39 // pred_fallthru
          _
      $region40: #{tpu_custom_call.1} parent=5 // pred_fallthru
        _
      %p1215 = scmp.le.s32.totalorder 2, %s19
      // Predicated region
      $region69: #{tpu_custom_call.1} parent=5 // pred_check
        %p1216 = pneg %p1215
      $region70: #{tpu_custom_call.1} parent=5 // pred_check_branch
        %1218 = sbr.rel (%p1216) target = $region72
      $region71: #{tpu_custom_call.1} parent=5 // pred_region
        %s1219 = ssub.s32 %s19, 2
        // Predicated region
        $region73: #{tpu_custom_call.1} parent=71 // pred_check
          %p1220 = pneg %p172
        $region74: #{tpu_custom_call.1} parent=71 // pred_check_branch
          %1222 = sbr.rel (%p1220) target = $region76
        $region75: #{tpu_custom_call.1} parent=71 // pred_region
          %s1223 = sand.u32 %s157, 1
          %s1224 = scalar_lea.sflag [#allocation5], %s1223
          %s1225 = sand.u32 %s157, 1
          %s1226 = smul.addr %s1225, 64
          %s1227 = scalar_lea.vmem [#allocation11], %s1226
          %1228 = dma.done %s1224, 1024
        $region76: #{tpu_custom_call.1} parent=71 // pred_fallthru
          _
      $region72: #{tpu_custom_call.1} parent=5 // pred_fallthru
        _
    $region6: #{tpu_custom_call.1} parent=1 // loop_footer
      %s23 = sadd.s32 1, %s19
    $region7: #{tpu_custom_call.1} parent=1 // loop_footer_branch
      %18 = sbr.rel target = $region3
    $region8: #{tpu_custom_call.1} parent=1 // loop_exit
      _
    %1229 = vsyncpa [#allocation4], 1
    %s1230 = scalar_lea.sflag [#allocation4], 1
    %1231 = vsyncpa %s1230, 1
    %1232 = vsyncpa [#allocation7], 1
    %1233 = vsyncpa [#allocation10], 1
    %1234 = vsyncpa [#allocation5], 1
    %s1235 = scalar_lea.sflag [#allocation5], 1
    %1236 = vsyncpa %s1235, 1

</llo_original>
